<compile_context>
chip_gen: v7x
topology: tpu7x:2x2x1
jax: 0.10.0
libtpu: 0.0.40
codegen_flags: <defaults>
</compile_context>

<pallas_src>
import functools

import jax
import jax.numpy as jnp
from jax.experimental import pallas as pl
from jax.experimental.pallas import tpu as pltpu


def _round_up(n, m):
    return ((n + m - 1) // m) * m


def _cdiv(a, b):
    return (a + b - 1) // b


def _tpu_vmem_capacity():
    """Physical VMEM bytes per TensorCore; conservative 64 MiB fallback."""
    try:
        info = pltpu.get_tpu_info()
        cap = getattr(info, "vmem_capacity_bytes", None)
        if cap:
            return int(cap)
    except Exception:
        pass
    return 64 * 1024 * 1024


_VMEM_CAP = _tpu_vmem_capacity()
_VMEM_LIMIT = int(0.7 * _VMEM_CAP)          # headroom for Mosaic internal scratch
_TIME_TILE_TARGET = 512 if _VMEM_CAP >= 96 * 1024 * 1024 else 256  # v5e/v6e vs v7x


# ----------------------------------------------------------------------------
# Kernel 1: dilated Conv1d + bias + ReLU + folded-BN, one output time tile.
# Grid: (batch, time-tiles), both parallel.  Dilated layers read the current
# time tile plus a 16-row look-ahead block of the next tile (the halo is at
# most dilation*(K-1) = 6 rows), so VMEM is O(t_tile).
# ----------------------------------------------------------------------------
def conv_bn_relu_kernel(*refs, k, dilation, halo):
    if halo > 0:
        x_ref, nxt_ref, w_ref, b_ref, s_ref, sh_ref, o_ref = refs
        t_tile = x_ref.shape[0]
        window = jnp.concatenate([x_ref[...], nxt_ref[...]], axis=0)
        # im2col: K shifted slices along the lane axis -> one MXU matmul, the
        # K-way reduction accumulates inside the MXU (no f32 VMEM round-trips).
        xin = jnp.concatenate(
            [jax.lax.slice_in_dim(window, t * dilation, t * dilation + t_tile,
                                  axis=0)
             for t in range(k)], axis=-1)
    else:
        x_ref, w_ref, b_ref, s_ref, sh_ref, o_ref = refs
        xin = x_ref[...]

    z = jnp.dot(xin, w_ref[...], preferred_element_type=jnp.float32)
    z = jnp.maximum(z + b_ref[...], 0.0)                       # bias + ReLU
    o_ref[...] = (z * s_ref[...] + sh_ref[...]).astype(o_ref.dtype)  # folded BN


def conv_bn_relu(x, w, b, scale, shift, *, k, dilation, grid_t, t_tile):
    """x: (B, T_pad, Cin) bf16; w: (k*Cin, Cout) bf16; params (1, Cout) f32.

    Writes (B, grid_t * t_tile, Cout) bf16; rows beyond the layer's valid
    length are finite garbage that valid rows downstream never consume.
    """
    B, T_pad, Cin = x.shape
    Cout = w.shape[1]
    halo = dilation * (k - 1)
    assert t_tile % 16 == 0 and halo <= 16
    assert w.shape[0] == k * Cin
    assert T_pad >= grid_t * t_tile + (16 if halo > 0 else 0), (T_pad, grid_t)

    in_specs = [pl.BlockSpec((None, t_tile, Cin), lambda bb, jj: (bb, jj, 0))]
    operands = [x]
    if halo > 0:
        bpt = t_tile // 16
        in_specs.append(pl.BlockSpec(
            (None, 16, Cin), lambda bb, jj, bpt=bpt: (bb, (jj + 1) * bpt, 0)))
        operands.append(x)
    in_specs += [
        pl.BlockSpec((k * Cin, Cout), lambda bb, jj: (0, 0)),
        pl.BlockSpec((1, Cout), lambda bb, jj: (0, 0)),
        pl.BlockSpec((1, Cout), lambda bb, jj: (0, 0)),
        pl.BlockSpec((1, Cout), lambda bb, jj: (0, 0)),
    ]
    operands += [w, b, scale, shift]

    return pl.pallas_call(
        functools.partial(conv_bn_relu_kernel, k=k, dilation=dilation, halo=halo),
        out_shape=jax.ShapeDtypeStruct((B, grid_t * t_tile, Cout), jnp.bfloat16),
        grid=(B, grid_t),
        in_specs=in_specs,
        out_specs=pl.BlockSpec((None, t_tile, Cout), lambda bb, jj: (bb, jj, 0)),
        compiler_params=pltpu.CompilerParams(
            dimension_semantics=("parallel", "parallel"),
            vmem_limit_bytes=_VMEM_LIMIT),
    )(*operands)


# ----------------------------------------------------------------------------
# Kernel 2: fused conv4(K=1)+ReLU+BN4 -> conv5(K=1)+ReLU -> TAP pooling.
# Grid: (batch, time-tiles); time is a reduction into the revisited (1, Cout5)
# output block.  BN5 scale*(1/T) and shift are applied once at the end; rows
# beyond the valid length are masked out of the sum.
# ----------------------------------------------------------------------------
def conv45_pool_kernel(x_ref, w4_ref, b4_ref, s4_ref, sh4_ref,
                       w5_ref, b5_ref, s5_ref, sh5_ref, o_ref,
                       *, t_tile, t_valid):
    j = pl.program_id(1)

    @pl.when(j == 0)
    def _():
        o_ref[...] = jnp.zeros_like(o_ref)

    h = jnp.dot(x_ref[...], w4_ref[...], preferred_element_type=jnp.float32)
    h = jnp.maximum(h + b4_ref[...], 0.0) * s4_ref[...] + sh4_ref[...]
    z = jnp.dot(h.astype(jnp.bfloat16), w5_ref[...],
                preferred_element_type=jnp.float32)
    z = jnp.maximum(z + b5_ref[...], 0.0)

    row = j * t_tile + jax.lax.broadcasted_iota(jnp.int32, (t_tile, 1), 0)
    z = jnp.where(row < t_valid, z, 0.0)
    o_ref[...] += jnp.sum(z, axis=0, keepdims=True)

    @pl.when(j == pl.num_programs(1) - 1)
    def _():
        o_ref[...] = o_ref[...] * (s5_ref[...] * (1.0 / t_valid)) + sh5_ref[...]


def conv45_tap(x, l4, l5, *, t_valid, t_tile):
    B, T_pad, Cin = x.shape
    C4 = l4["w"].shape[1]
    Cout = l5["w"].shape[1]
    grid_t = _cdiv(t_valid, t_tile)
    assert T_pad >= grid_t * t_tile

    def vec(c):
        return pl.BlockSpec((1, c), lambda bb, jj: (0, 0))

    out = pl.pallas_call(
        functools.partial(conv45_pool_kernel, t_tile=t_tile, t_valid=t_valid),
        out_shape=jax.ShapeDtypeStruct((B, 1, Cout), jnp.float32),
        grid=(B, grid_t),
        in_specs=[
            pl.BlockSpec((None, t_tile, Cin), lambda bb, jj: (bb, jj, 0)),
            pl.BlockSpec((Cin, C4), lambda bb, jj: (0, 0)),
            vec(C4), vec(C4), vec(C4),
            pl.BlockSpec((C4, Cout), lambda bb, jj: (0, 0)),
            vec(Cout), vec(Cout), vec(Cout),
        ],
        out_specs=pl.BlockSpec((None, 1, Cout), lambda bb, jj: (bb, 0, 0)),
        compiler_params=pltpu.CompilerParams(
            dimension_semantics=("parallel", "arbitrary"),
            vmem_limit_bytes=_VMEM_LIMIT),
    )(x, l4["w"], l4["b"], l4["scale"], l4["shift"],
      l5["w"], l5["b"], l5["scale"], l5["shift"])
    return out[:, 0, :]


# ----------------------------------------------------------------------------
# Head: fc1 + ReLU + fc2.  Plain XLA per the perf review: a (B, 1536) matmul
# with tiny B underfills the MXU and a dedicated pallas_call only adds launch
# overhead + masked sub-(8,128) stores.
# ----------------------------------------------------------------------------
def head(pooled, p):
    h = jnp.dot(pooled.astype(jnp.bfloat16), p["fc1_w"],
                preferred_element_type=jnp.float32) + p["fc1_b"]
    h = jnp.maximum(h, 0.0)
    return jnp.dot(h.astype(jnp.bfloat16), p["fc2_w"],
                   preferred_element_type=jnp.float32) + p["fc2_b"]


# ----------------------------------------------------------------------------
# Parameter construction (deterministic, synthetic) and inference prep.
# ----------------------------------------------------------------------------
def make_params(key, n_mels, embedding_dim):
    keys = jax.random.split(key, 40)
    ki = iter(range(len(keys)))

    def conv_p(cin, cout, k):
        w = jax.random.normal(keys[next(ki)], (k, cin, cout), jnp.float32) * 0.05
        b = jax.random.normal(keys[next(ki)], (1, cout), jnp.float32) * 0.05
        return w, b

    def bn_p(c):
        gamma = 1.0 + 0.1 * jax.random.normal(keys[next(ki)], (1, c), jnp.float32)
        beta = 0.1 * jax.random.normal(keys[next(ki)], (1, c), jnp.float32)
        mean = 0.1 * jax.random.normal(keys[next(ki)], (1, c), jnp.float32)
        var = 1.0 + 0.1 * jax.nn.softplus(
            jax.random.normal(keys[next(ki)], (1, c), jnp.float32))
        return gamma, beta, mean, var

    p = {}
    p["conv1"] = conv_p(n_mels, 512, 5);  p["bn1"] = bn_p(512)
    p["conv2"] = conv_p(512, 512, 3);     p["bn2"] = bn_p(512)
    p["conv3"] = conv_p(512, 512, 3);     p["bn3"] = bn_p(512)
    p["conv4"] = conv_p(512, 512, 1);     p["bn4"] = bn_p(512)
    p["conv5"] = conv_p(512, 1500, 1);    p["bn5"] = bn_p(1500)
    p["fc1_w"] = jax.random.normal(keys[next(ki)], (1500, 512), jnp.float32) * 0.02
    p["fc1_b"] = jax.random.normal(keys[next(ki)], (1, 512), jnp.float32) * 0.02
    p["fc2_w"] = jax.random.normal(keys[next(ki)], (512, embedding_dim), jnp.float32) * 0.02
    p["fc2_b"] = jax.random.normal(keys[next(ki)], (1, embedding_dim), jnp.float32) * 0.02
    return p


def prepare_params(raw, n_mels, eps=1e-5):
    """Fold BN to scale/shift, reshape conv weights to im2col (K*Cin, Cout)
    layout (bf16), pad the conv1 contraction and conv5 Cout to 128-multiples."""
    def fold_bn(bn):
        gamma, beta, mean, var = bn
        scale = gamma * jax.lax.rsqrt(var + eps)
        shift = beta - mean * scale
        return scale, shift

    p = {"n_mels": n_mels}

    # conv1: K=5 taps im2col'd in the wrapper -> contraction 5*n_mels (200->256)
    w1, b1 = raw["conv1"]
    k1, _, c1 = w1.shape
    kc1 = k1 * n_mels
    kc1_pad = _round_up(kc1, 128)
    w1r = jnp.pad(w1.reshape(kc1, c1), ((0, kc1_pad - kc1), (0, 0)))
    s1, sh1 = fold_bn(raw["bn1"])
    p["l1"] = dict(w=w1r.astype(jnp.bfloat16), b=b1, scale=s1, shift=sh1,
                   k=1, dilation=1)
    p["kc1_pad"] = kc1_pad

    # conv2 / conv3: (K, Cin, Cout) -> (K*Cin, Cout) for a single MXU dot.
    for cname, bname, dil, lname in (("conv2", "bn2", 2, "l2"),
                                     ("conv3", "bn3", 3, "l3")):
        w, b = raw[cname]
        K, Cin, Cout = w.shape
        s, sh = fold_bn(raw[bname])
        p[lname] = dict(w=w.reshape(K * Cin, Cout).astype(jnp.bfloat16),
                        b=b, scale=s, shift=sh, k=K, dilation=dil)

    # conv4 (K=1): fused into the pooling kernel.
    w4, b4 = raw["conv4"]
    s4, sh4 = fold_bn(raw["bn4"])
    p["l4"] = dict(w=w4[0].astype(jnp.bfloat16), b=b4, scale=s4, shift=sh4,
                   k=1, dilation=1)

    # conv5 (K=1) + bn5: Cout padded 1500 -> 1536; pad lanes pool to exactly 0.
    w5, b5 = raw["conv5"]
    c5 = w5.shape[2]
    pad5 = _round_up(c5, 128) - c5
    s5, sh5 = fold_bn(raw["bn5"])
    p["l5"] = dict(
        w=jnp.pad(w5[0], ((0, 0), (0, pad5))).astype(jnp.bfloat16),
        b=jnp.pad(b5, ((0, 0), (0, pad5))),
        scale=jnp.pad(s5, ((0, 0), (0, pad5)), constant_values=1.0),
        shift=jnp.pad(sh5, ((0, 0), (0, pad5))),
        k=1, dilation=1)

    p["fc1_w"] = jnp.pad(raw["fc1_w"], ((0, pad5), (0, 0))).astype(jnp.bfloat16)
    p["fc1_b"] = raw["fc1_b"]
    p["fc2_w"] = raw["fc2_w"].astype(jnp.bfloat16)
    p["fc2_b"] = raw["fc2_b"]
    return p


# ----------------------------------------------------------------------------
# Full TDNN forward (Pallas kernels for the hot path).
# ----------------------------------------------------------------------------
def tdnn_forward(x_ncw, p):
    """x_ncw: (B, n_mels, T) -- PyTorch layout.  Returns (B, embedding_dim)."""
    B, n_mels, T0 = x_ncw.shape
    T1 = T0 - 4            # conv1: K=5, d=1
    T2 = T1 - 4            # conv2: K=3, d=2
    T3 = T2 - 6            # conv3: K=3, d=3 (conv4/conv5 are K=1)
    assert T3 >= 1, "input too short for the TDNN receptive field"

    t_tile = min(_TIME_TILE_TARGET, _round_up(max(T3, 16), 16))
    # Each layer writes ceil(valid / t_tile) tiles; +1 wherever the following
    # dilated layer needs its 16-row look-ahead block to stay in bounds.
    g3 = _cdiv(T3, t_tile)
    g2 = max(_cdiv(T2, t_tile), g3 + 1)
    g1 = max(_cdiv(T1, t_tile), g2 + 1)

    # conv1 im2col in the wrapper (cheap: raw input has only n_mels channels).
    x = jnp.transpose(x_ncw, (0, 2, 1)).astype(jnp.float32)   # (B, T0, n_mels)
    need = g1 * t_tile + 4
    if need > T0:
        x = jnp.pad(x, ((0, 0), (0, need - T0), (0, 0)))
    x1 = jnp.concatenate([x[:, t:t + g1 * t_tile, :] for t in range(5)], axis=-1)
    x1 = jnp.pad(x1, ((0, 0), (0, 0), (0, p["kc1_pad"] - 5 * n_mels)))
    x1 = x1.astype(jnp.bfloat16)

    l1, l2, l3 = p["l1"], p["l2"], p["l3"]
    h = conv_bn_relu(x1, l1["w"], l1["b"], l1["scale"], l1["shift"],
                     k=1, dilation=1, grid_t=g1, t_tile=t_tile)
    h = conv_bn_relu(h, l2["w"], l2["b"], l2["scale"], l2["shift"],
                     k=3, dilation=2, grid_t=g2, t_tile=t_tile)
    h = conv_bn_relu(h, l3["w"], l3["b"], l3["scale"], l3["shift"],
                     k=3, dilation=3, grid_t=g3, t_tile=t_tile)
    pooled = conv45_tap(h, p["l4"], p["l5"], t_valid=T3, t_tile=t_tile)
    return head(pooled, p)


# ----------------------------------------------------------------------------
# Pure-JAX reference (same math / same dtypes) for correctness checking.
# ----------------------------------------------------------------------------
def tdnn_reference(x_ncw, p):
    B, n_mels, T0 = x_ncw.shape
    x = jnp.transpose(x_ncw, (0, 2, 1)).astype(jnp.float32)
    T1 = T0 - 4
    x1 = jnp.concatenate([x[:, t:t + T1, :] for t in range(5)], axis=-1)
    x1 = jnp.pad(x1, ((0, 0), (0, 0), (0, p["kc1_pad"] - 5 * n_mels)))
    x1 = x1.astype(jnp.bfloat16)

    def conv_ref(xx, lp):
        k, d = lp["k"], lp["dilation"]
        t_out = xx.shape[1] - d * (k - 1)
        if k > 1:
            xx = jnp.concatenate(
                [xx[:, t * d:t * d + t_out, :] for t in range(k)], axis=-1)
        z = jnp.einsum("btc,cd->btd", xx, lp["w"],
                       preferred_element_type=jnp.float32)
        z = jnp.maximum(z + lp["b"], 0.0)
        return (z * lp["scale"] + lp["shift"]).astype(jnp.bfloat16)

    h = conv_ref(x1, p["l1"])
    h = conv_ref(h, p["l2"])
    h = conv_ref(h, p["l3"])

    l4, l5 = p["l4"], p["l5"]
    h4 = jnp.einsum("btc,cd->btd", h, l4["w"], preferred_element_type=jnp.float32)
    h4 = jnp.maximum(h4 + l4["b"], 0.0) * l4["scale"] + l4["shift"]
    z = jnp.einsum("btc,cd->btd", h4.astype(jnp.bfloat16), l5["w"],
                   preferred_element_type=jnp.float32)
    z = jnp.maximum(z + l5["b"], 0.0)
    pooled = jnp.mean(z, axis=1) * l5["scale"] + l5["shift"]   # TAP + BN5
    return head(pooled, p)


if __name__ == "__main__":
    B, n_mels, T, emb_dim = 2, 40, 64, 32
    key = jax.random.PRNGKey(0)
    kx, kp = jax.random.split(key)
    x = jax.random.normal(kx, (B, n_mels, T), jnp.float32)  # [batch, dim, time]

    raw = make_params(kp, n_mels, emb_dim)
    params = prepare_params(raw, n_mels)

    out = jax.block_until_ready(tdnn_forward(x, params))
    ref = jax.block_until_ready(tdnn_reference(x, params))

    assert out.shape == (B, emb_dim), out.shape
    err = float(jnp.max(jnp.abs(out - ref)))
    ref_scale = float(jnp.max(jnp.abs(ref))) + 1e-6
    assert err <= 2e-2 * ref_scale + 1e-3, (err, ref_scale)
    print("KERNEL_OK")
</pallas_src>

<mosaic_0001>
module attributes {stable_mosaic.version = 11 : i64} {
  func.func @conv_bn_relu_kernel(%arg0: i32, %arg1: i32, %arg2: memref<1x64x256xbf16, #tpu.memory_space<vmem>>, %arg3: memref<256x512xbf16, #tpu.memory_space<vmem>>, %arg4: memref<1x512xf32, #tpu.memory_space<vmem>>, %arg5: memref<1x512xf32, #tpu.memory_space<vmem>>, %arg6: memref<1x512xf32, #tpu.memory_space<vmem>>, %arg7: memref<1x64x512xbf16, #tpu.memory_space<vmem>>) attributes {dimension_semantics = [#tpu.dimension_semantics<parallel>, #tpu.dimension_semantics<parallel>], iteration_bounds = array<i64: 2, 3>, scalar_prefetch = 0 : i64, scratch_operands = 0 : i64, tpu.core_type = #tpu.core_type<tc>, window_params = [{transform_indices = @transform_0, window_bounds = array<i64: 1, 64, 256>}, {pipeline_mode = #tpu.pipeline_mode<synchronous>, transform_indices = @transform_1, window_bounds = array<i64: 256, 512>}, {pipeline_mode = #tpu.pipeline_mode<synchronous>, transform_indices = @transform_2, window_bounds = array<i64: 1, 512>}, {pipeline_mode = #tpu.pipeline_mode<synchronous>, transform_indices = @transform_3, window_bounds = array<i64: 1, 512>}, {pipeline_mode = #tpu.pipeline_mode<synchronous>, transform_indices = @transform_4, window_bounds = array<i64: 1, 512>}, {transform_indices = @transform_5, window_bounds = array<i64: 1, 64, 512>}]} {
    %c0 = arith.constant 0 : index
    %c0_0 = arith.constant 0 : index
    %c0_1 = arith.constant 0 : index
    %0 = vector.load %arg2[%c0, %c0_0, %c0_1] : memref<1x64x256xbf16, #tpu.memory_space<vmem>>, vector<1x64x256xbf16>
    %1 = vector.shape_cast %0 : vector<1x64x256xbf16> to vector<64x256xbf16>
    %c0_2 = arith.constant 0 : index
    %c0_3 = arith.constant 0 : index
    %2 = vector.load %arg3[%c0_2, %c0_3] : memref<256x512xbf16, #tpu.memory_space<vmem>>, vector<256x512xbf16>
    %cst = arith.constant dense<0.000000e+00> : vector<64x512xf32>
    %3 = tpu.matmul %1, %2, %cst {dimension_numbers = #tpu.dot_dimension_numbers<[1], [0], [0], [1], [0, 0, 1, 1], [], []>} : vector<64x256xbf16>, vector<256x512xbf16>, vector<64x512xf32> -> vector<64x512xf32>
    %c0_4 = arith.constant 0 : index
    %c0_5 = arith.constant 0 : index
    %4 = vector.load %arg4[%c0_4, %c0_5] : memref<1x512xf32, #tpu.memory_space<vmem>>, vector<1x512xf32>
    %5 = vector.broadcast %4 : vector<1x512xf32> to vector<64x512xf32>
    %6 = arith.addf %3, %5 : vector<64x512xf32>
    %cst_6 = arith.constant 0.000000e+00 : f32
    %7 = vector.broadcast %cst_6 : f32 to vector<64x512xf32>
    %8 = arith.maximumf %6, %7 : vector<64x512xf32>
    %c0_7 = arith.constant 0 : index
    %c0_8 = arith.constant 0 : index
    %9 = vector.load %arg5[%c0_7, %c0_8] : memref<1x512xf32, #tpu.memory_space<vmem>>, vector<1x512xf32>
    %10 = vector.broadcast %9 : vector<1x512xf32> to vector<64x512xf32>
    %11 = arith.mulf %8, %10 : vector<64x512xf32>
    %c0_9 = arith.constant 0 : index
    %c0_10 = arith.constant 0 : index
    %12 = vector.load %arg6[%c0_9, %c0_10] : memref<1x512xf32, #tpu.memory_space<vmem>>, vector<1x512xf32>
    %13 = vector.broadcast %12 : vector<1x512xf32> to vector<64x512xf32>
    %14 = arith.addf %11, %13 : vector<64x512xf32>
    %15 = arith.truncf %14 : vector<64x512xf32> to vector<64x512xbf16>
    %c0_11 = arith.constant 0 : index
    %c0_12 = arith.constant 0 : index
    %c0_13 = arith.constant 0 : index
    %16 = vector.load %arg7[%c0_11, %c0_12, %c0_13] : memref<1x64x512xbf16, #tpu.memory_space<vmem>>, vector<1x64x512xbf16>
    %17 = vector.shape_cast %16 : vector<1x64x512xbf16> to vector<64x512xbf16>
    %18 = vector.shape_cast %15 : vector<64x512xbf16> to vector<1x64x512xbf16>
    tpu.vector_store %arg7[%c0_11, %c0_12, %c0_13], %18 {strides = array<i32>} : memref<1x64x512xbf16, #tpu.memory_space<vmem>>, vector<1x64x512xbf16>,
    return
  }
  func.func @transform_0(%arg0: i32, %arg1: i32) -> (i32, i32, i32) {
    %c0_i32 = arith.constant 0 : i32
    %c0_i32_0 = arith.constant 0 : i32
    return %arg0, %arg1, %c0_i32 : i32, i32, i32
  }
  func.func @transform_1(%arg0: i32, %arg1: i32) -> (i32, i32) {
    %c0_i32 = arith.constant 0 : i32
    %c0_i32_0 = arith.constant 0 : i32
    %c0_i32_1 = arith.constant 0 : i32
    return %c0_i32, %c0_i32_0 : i32, i32
  }
  func.func @transform_2(%arg0: i32, %arg1: i32) -> (i32, i32) {
    %c0_i32 = arith.constant 0 : i32
    %c0_i32_0 = arith.constant 0 : i32
    %c0_i32_1 = arith.constant 0 : i32
    return %c0_i32, %c0_i32_0 : i32, i32
  }
  func.func @transform_3(%arg0: i32, %arg1: i32) -> (i32, i32) {
    %c0_i32 = arith.constant 0 : i32
    %c0_i32_0 = arith.constant 0 : i32
    %c0_i32_1 = arith.constant 0 : i32
    return %c0_i32, %c0_i32_0 : i32, i32
  }
  func.func @transform_4(%arg0: i32, %arg1: i32) -> (i32, i32) {
    %c0_i32 = arith.constant 0 : i32
    %c0_i32_0 = arith.constant 0 : i32
    %c0_i32_1 = arith.constant 0 : i32
    return %c0_i32, %c0_i32_0 : i32, i32
  }
  func.func @transform_5(%arg0: i32, %arg1: i32) -> (i32, i32, i32) {
    %c0_i32 = arith.constant 0 : i32
    %c0_i32_0 = arith.constant 0 : i32
    return %arg0, %arg1, %c0_i32 : i32, i32, i32
  }
}

</mosaic_0001>

<llo_original>
// kernel: tpu_custom_call.1
$region0: #{tpu_custom_call.1}
  #allocation0 [shape = 'u32[]', space=smem, size = 0x4, offset = 0x4, fixed_abs, tag = 'smem constant byte address 0x4 - core index']
  #allocation1 [shape = 'u32[144,128]{1,0:T(1,128)}', space=vmem, size = 0x12000, scoped, tag = 'internal scratch']
  %s0 = inlined_call_operand.hbm [shape: bf16[2,192,256], index: 0, kind: input, shape index: {}]
  %s1 = inlined_call_operand.hbm [shape: bf16[256,512], index: 1, kind: input, shape index: {}]
  %s2 = inlined_call_operand.vmem [shape: f32[1,512], index: 2, kind: input, shape index: {}]
  %s3 = inlined_call_operand.vmem [shape: f32[1,512], index: 3, kind: input, shape index: {}]
  %s4 = inlined_call_operand.vmem [shape: f32[1,512], index: 4, kind: input, shape index: {}]
  %s5 = inlined_call_operand.hbm [shape: bf16[2,192,512], index: 5, kind: output, shape index: {}]
  %s6 = sld [smem:[#allocation0]]
  $region61: #{tpu_custom_call.1} parent=0
    _
  %s8 = ssub.s32 1, %s6
  %s9 = scalar_select 0, %s8, %s6
  $region1: #{tpu_custom_call.1} parent=0
    #allocation2 [shape = 'u8[65536]{0}', space=vmem, size = 0x10000, scoped, tag = 'input window, operand 0']
    #allocation3 [shape = 's32[2]{0}', space=sflag, size = 0x8, scoped, tag = 'scoped memory for tpu_custom_call.1']
    #allocation4 [shape = 's32[2]{0}', space=sflag, size = 0x8, scoped, tag = 'scoped memory for tpu_custom_call.1']
    #allocation5 [shape = 'u8[262144]{0}', space=vmem, size = 0x40000, scoped, tag = 'input window, operand 1, single buffered']
    #allocation6 [shape = 's32[1]{0}', space=sflag, size = 0x4, scoped, tag = 'scoped memory for tpu_custom_call.1']
    #allocation7 [shape = 'u8[131072]{0}', space=vmem, size = 0x20000, scoped, tag = 'output window, operand 0']
    %10 = vsyncpa [#allocation3], 0
    %s11 = scalar_lea.sflag [#allocation3], 1
    %12 = vsyncpa %s11, 0
    %13 = vsyncpa [#allocation6], 0
    %14 = vsyncpa [#allocation4], 0
    %s15 = scalar_lea.sflag [#allocation4], 1
    %16 = vsyncpa %s15, 0
    loop: start=0, step=1, limit=8
    $region2: #{tpu_custom_call.1} parent=1 // loop_pre_header
      _
    $region3: #{tpu_custom_call.1} parent=1 // loop_header
      %s18 = sphi 0, %s22
      %p19 = scmp.ge.s32.totalorder %s18, 8
      %s25 = sphi 0, %s37
      %s26 = sphi 0, %s33
      %s27 = sphi 0, %s25
      %s28 = sphi 0, %s26
      %s29 = sphi 0, %s27
      %s30 = sphi 0, %s28
      %s42 = sphi 0, %s44
      %s45 = sphi 0, %s42
      %s46 = sphi 0, %s45
      %s62 = sphi 0, %s46
      %s66 = sphi 0, %s66
      %s68 = sphi 0, %s66
      %s69 = sphi 0, %s68
      %s83 = sphi 0, %s69
      %s87 = sphi 0, %s87
      %s89 = sphi 0, %s87
      %s90 = sphi 0, %s89
      %s104 = sphi 0, %s90
      %s108 = sphi 0, %s108
      %s110 = sphi 0, %s108
      %s111 = sphi 0, %s110
      %s125 = sphi 0, %s111
      %s129 = sphi 0, %s129
      %s131 = sphi 0, %s129
      %s132 = sphi 0, %s131
      %s146 = sphi 0, %s132
      %s154 = sphi 0, %s156
      %s157 = sphi 0, %s154
      %s158 = sphi 0, %s157
      %s174 = sphi 0, %s158
    $region4: #{tpu_custom_call.1} parent=1 // loop_header_branch
      %21 = sbr.rel (%p19) target = $region8
    $region5: #{tpu_custom_call.1} parent=1 // loop_body
      %s23 = ssub.s32 %s18, 1
      %s24 = ssub.s32 %s18, 2
      %s31 = sadd.s32 1, %s26
      %p32 = scmp.ge.s32.totalorder %s31, 3
      %s33 = scalar_select %p32, 0, %s31
      %s34 = sadd.s32 1, %s25
      %s35 = scalar_select %p32, %s34, %s25
      %p36 = scmp.ge.s32.totalorder %s35, 2
      %s37 = scalar_select %p36, 0, %s35
      %s38 = ssub.s32 %s25, %s37
      %s39 = ssub.s32 %s26, %s33
      %s40 = sor.u32 %s38, %s39
      %p41 = scmp.eq.s32.totalorder %s40, 0
      %s43 = sadd.s32 %s42, 1
      %s44 = scalar_select %p41, %s42, %s43
      %p47 = pneg %p41
      %p48 = scmp.eq.s32.totalorder %s18, 5
      %p49 = por %p47, %p48
      %p50 = scmp.ne.s32.totalorder %s42, %s45
      %p51 = scmp.eq.s32.totalorder %s18, 0
      %p52 = por %p50, %p51
      %p53 = scmp.ne.s32.totalorder %s42, %s45
      %p54 = scmp.eq.s32.totalorder %s23, 5
      %p55 = por %p53, %p54
      %p56 = scmp.ne.s32.totalorder %s45, %s46
      %p57 = scmp.eq.s32.totalorder %s23, 0
      %p58 = por %p56, %p57
      %p59 = scmp.ne.s32.totalorder %s45, %s46
      %p60 = scmp.eq.s32.totalorder %s24, 5
      %p61 = por %p59, %p60
      %p63 = scmp.ne.s32.totalorder %s46, %s62
      %p64 = scmp.eq.s32.totalorder %s24, 0
      %p65 = por %p63, %p64
      %s67 = sadd.s32 %s66, 1
      %p70 = scmp.eq.s32.totalorder %s18, 5
      %p71 = scmp.ne.s32.totalorder %s66, %s68
      %p72 = scmp.eq.s32.totalorder %s18, 0
      %p73 = por %p71, %p72
      %p74 = scmp.ne.s32.totalorder %s66, %s68
      %p75 = scmp.eq.s32.totalorder %s23, 5
      %p76 = por %p74, %p75
      %p77 = scmp.ne.s32.totalorder %s68, %s69
      %p78 = scmp.eq.s32.totalorder %s23, 0
      %p79 = por %p77, %p78
      %p80 = scmp.ne.s32.totalorder %s68, %s69
      %p81 = scmp.eq.s32.totalorder %s24, 5
      %p82 = por %p80, %p81
      %p84 = scmp.ne.s32.totalorder %s69, %s83
      %p85 = scmp.eq.s32.totalorder %s24, 0
      %p86 = por %p84, %p85
      %s88 = sadd.s32 %s87, 1
      %p91 = scmp.eq.s32.totalorder %s18, 5
      %p92 = scmp.ne.s32.totalorder %s87, %s89
      %p93 = scmp.eq.s32.totalorder %s18, 0
      %p94 = por %p92, %p93
      %p95 = scmp.ne.s32.totalorder %s87, %s89
      %p96 = scmp.eq.s32.totalorder %s23, 5
      %p97 = por %p95, %p96
      %p98 = scmp.ne.s32.totalorder %s89, %s90
      %p99 = scmp.eq.s32.totalorder %s23, 0
      %p100 = por %p98, %p99
      %p101 = scmp.ne.s32.totalorder %s89, %s90
      %p102 = scmp.eq.s32.totalorder %s24, 5
      %p103 = por %p101, %p102
      %p105 = scmp.ne.s32.totalorder %s90, %s104
      %p106 = scmp.eq.s32.totalorder %s24, 0
      %p107 = por %p105, %p106
      %s109 = sadd.s32 %s108, 1
      %p112 = scmp.eq.s32.totalorder %s18, 5
      %p113 = scmp.ne.s32.totalorder %s108, %s110
      %p114 = scmp.eq.s32.totalorder %s18, 0
      %p115 = por %p113, %p114
      %p116 = scmp.ne.s32.totalorder %s108, %s110
      %p117 = scmp.eq.s32.totalorder %s23, 5
      %p118 = por %p116, %p117
      %p119 = scmp.ne.s32.totalorder %s110, %s111
      %p120 = scmp.eq.s32.totalorder %s23, 0
      %p121 = por %p119, %p120
      %p122 = scmp.ne.s32.totalorder %s110, %s111
      %p123 = scmp.eq.s32.totalorder %s24, 5
      %p124 = por %p122, %p123
      %p126 = scmp.ne.s32.totalorder %s111, %s125
      %p127 = scmp.eq.s32.totalorder %s24, 0
      %p128 = por %p126, %p127
      %s130 = sadd.s32 %s129, 1
      %p133 = scmp.eq.s32.totalorder %s18, 5
      %p134 = scmp.ne.s32.totalorder %s129, %s131
      %p135 = scmp.eq.s32.totalorder %s18, 0
      %p136 = por %p134, %p135
      %p137 = scmp.ne.s32.totalorder %s129, %s131
      %p138 = scmp.eq.s32.totalorder %s23, 5
      %p139 = por %p137, %p138
      %p140 = scmp.ne.s32.totalorder %s131, %s132
      %p141 = scmp.eq.s32.totalorder %s23, 0
      %p142 = por %p140, %p141
      %p143 = scmp.ne.s32.totalorder %s131, %s132
      %p144 = scmp.eq.s32.totalorder %s24, 5
      %p145 = por %p143, %p144
      %p147 = scmp.ne.s32.totalorder %s132, %s146
      %p148 = scmp.eq.s32.totalorder %s24, 0
      %p149 = por %p147, %p148
      %s150 = ssub.s32 %s25, %s37
      %s151 = ssub.s32 %s26, %s33
      %s152 = sor.u32 %s150, %s151
      %p153 = scmp.eq.s32.totalorder %s152, 0
      %s155 = sadd.s32 %s154, 1
      %s156 = scalar_select %p153, %s154, %s155
      %p159 = pneg %p153
      %p160 = scmp.eq.s32.totalorder %s18, 5
      %p161 = por %p159, %p160
      %p162 = scmp.ne.s32.totalorder %s154, %s157
      %p163 = scmp.eq.s32.totalorder %s18, 0
      %p164 = por %p162, %p163
      %p165 = scmp.ne.s32.totalorder %s154, %s157
      %p166 = scmp.eq.s32.totalorder %s23, 5
      %p167 = por %p165, %p166
      %p168 = scmp.ne.s32.totalorder %s157, %s158
      %p169 = scmp.eq.s32.totalorder %s23, 0
      %p170 = por %p168, %p169
      %p171 = scmp.ne.s32.totalorder %s157, %s158
      %p172 = scmp.eq.s32.totalorder %s24, 5
      %p173 = por %p171, %p172
      %p175 = scmp.ne.s32.totalorder %s158, %s174
      %p176 = scmp.eq.s32.totalorder %s24, 0
      %p177 = por %p175, %p176
      %p178 = scmp.le.s32.totalorder 1, %s18
      %p179 = scmp.lt.s32.totalorder %s18, 7
      %p180 = pnand %p178, %p179
      %p181 = pneg %p180
      // Predicated region
      $region9: #{tpu_custom_call.1} parent=5 // pred_check
        _
      $region10: #{tpu_custom_call.1} parent=5 // pred_check_branch
        %183 = sbr.rel (%p180) target = $region12
      $region11: #{tpu_custom_call.1} parent=5 // pred_region
        %s184 = ssub.s32 %s18, 1
        // Predicated region
        $region13: #{tpu_custom_call.1} parent=11 // pred_check
          %p185 = pneg %p79
        $region14: #{tpu_custom_call.1} parent=11 // pred_check_branch
          %187 = sbr.rel (%p185) target = $region16
        $region15: #{tpu_custom_call.1} parent=11 // pred_region
          %s189 = ssub.s32 8192, 8192
          %190 = vsyncadd [#allocation6], %s189
          %s191 = sshll.u32 [#allocation5], 4
          %s192 = int_to_ptr.vmem [resolvable:$true] %s191
          %197 = dma.hbm_to_vmem [thread:$0]  %s1, 8192, %s192, [#allocation6], 256, 256, 16
        $region16: #{tpu_custom_call.1} parent=11 // pred_fallthru
          _
        // Predicated region
        $region17: #{tpu_custom_call.1} parent=11 // pred_check
          %p198 = pneg %p100
        $region18: #{tpu_custom_call.1} parent=11 // pred_check_branch
          %200 = sbr.rel (%p198) target = $region20
        $region19: #{tpu_custom_call.1} parent=11 // pred_region
          _
        $region20: #{tpu_custom_call.1} parent=11 // pred_fallthru
          _
        // Predicated region
        $region21: #{tpu_custom_call.1} parent=11 // pred_check
          %p201 = pneg %p121
        $region22: #{tpu_custom_call.1} parent=11 // pred_check_branch
          %203 = sbr.rel (%p201) target = $region24
        $region23: #{tpu_custom_call.1} parent=11 // pred_region
          _
        $region24: #{tpu_custom_call.1} parent=11 // pred_fallthru
          _
        // Predicated region
        $region25: #{tpu_custom_call.1} parent=11 // pred_check
          %p204 = pneg %p142
        $region26: #{tpu_custom_call.1} parent=11 // pred_check_branch
          %206 = sbr.rel (%p204) target = $region28
        $region27: #{tpu_custom_call.1} parent=11 // pred_region
          _
        $region28: #{tpu_custom_call.1} parent=11 // pred_fallthru
          _
      $region12: #{tpu_custom_call.1} parent=5 // pred_fallthru
        _
      %p207 = scmp.lt.s32.totalorder %s18, 6
      // Predicated region
      $region29: #{tpu_custom_call.1} parent=5 // pred_check
        %p208 = pneg %p207
      $region30: #{tpu_custom_call.1} parent=5 // pred_check_branch
        %210 = sbr.rel (%p208) target = $region32
      $region31: #{tpu_custom_call.1} parent=5 // pred_region
        // Predicated region
        $region33: #{tpu_custom_call.1} parent=31 // pred_check
          %p211 = pneg %p52
        $region34: #{tpu_custom_call.1} parent=31 // pred_check_branch
          %213 = sbr.rel (%p211) target = $region36
        $region35: #{tpu_custom_call.1} parent=31 // pred_region
          %s214 = sand.u32 %s42, 1
          %s215 = scalar_lea.sflag [#allocation3], %s214
          %s216 = sand.u32 %s42, 1
          %s217 = smul.addr %s216, 64
          %s218 = scalar_lea.vmem [#allocation2], %s217
          %s219 = smul.u32 8, %s26
          %s221 = ssub.s32 1024, 1024
          %222 = vsyncadd %s215, %s221
          %s223 = smul.addr %s219, 2
          %s224 = smul.addr %s25, 48
          %s225 = sadd.s32 %s223, %s224
          %s226 = smul.addr %s225, 64
          %s227 = scalar_lea.hbm %s0, %s226
          %s228 = sshll.u32 %s218, 4
          %s229 = int_to_ptr.vmem [resolvable:$true] %s228
          %234 = dma.hbm_to_vmem [thread:$0]  %s227, 1024, %s229, %s215, 128, 128, 8
        $region36: #{tpu_custom_call.1} parent=31 // pred_fallthru
          _
      $region32: #{tpu_custom_call.1} parent=5 // pred_fallthru
        _
      %p235 = scmp.le.s32.totalorder 1, %s18
      %p236 = scmp.lt.s32.totalorder %s18, 7
      %p237 = pnand %p235, %p236
      %p238 = pneg %p237
      // Predicated region
      $region37: #{tpu_custom_call.1} parent=5 // pred_check
        _
      $region38: #{tpu_custom_call.1} parent=5 // pred_check_branch
        %240 = sbr.rel (%p237) target = $region40
      $region39: #{tpu_custom_call.1} parent=5 // pred_region
        %s241 = ssub.s32 %s18, 1
        %s242 = sand.u32 %s45, 1
        %s243 = scalar_lea.sflag [#allocation3], %s242
        %s244 = sand.u32 %s45, 1
        %s245 = smul.addr %s244, 64
        %s246 = scalar_lea.vmem [#allocation2], %s245
        // Predicated region
        $region41: #{tpu_custom_call.1} parent=39 // pred_check
          %p247 = pneg %p58
        $region42: #{tpu_custom_call.1} parent=39 // pred_check_branch
          %249 = sbr.rel (%p247) target = $region44
        $region43: #{tpu_custom_call.1} parent=39 // pred_region
          %250 = dma.done %s243, 1024
        $region44: #{tpu_custom_call.1} parent=39 // pred_fallthru
          _
        // Predicated region
        $region45: #{tpu_custom_call.1} parent=39 // pred_check
          %p251 = pneg %p79
        $region46: #{tpu_custom_call.1} parent=39 // pred_check_branch
          %253 = sbr.rel (%p251) target = $region48
        $region47: #{tpu_custom_call.1} parent=39 // pred_region
          %254 = dma.done [#allocation6], 8192
        $region48: #{tpu_custom_call.1} parent=39 // pred_fallthru
          _
        %s255 = sand.u32 %s45, 1
        %s256 = scalar_lea.sflag [#allocation3], %s255
        %s257 = sand.u32 %s45, 1
        %s258 = smul.addr %s257, 64
        %s259 = scalar_lea.vmem [#allocation2], %s258
        %p260 = pneg %p58
        %p261 = pneg %p55
        %p262 = pneg %p79
        %p263 = pneg %p76
        %p264 = pneg %p100
        %p265 = pneg %p97
        %p266 = pneg %p121
        %p267 = pneg %p118
        %p268 = pneg %p142
        %p269 = pneg %p139
        %p270 = pneg %p170
        %p271 = pneg %p167
        %s272 = sand.u32 %s157, 1
        %s273 = scalar_lea.sflag [#allocation4], %s272
        %s274 = sand.u32 %s157, 1
        %s275 = smul.addr %s274, 128
        %s276 = scalar_lea.vmem [#allocation7], %s275
        %s277 = smul.u32 8, %s28
        %s278 = smul.u32 8, %s28
        %v279 = vld [vmem:[%s246] sm:$0xff]
        %v280 = vld [vmem:[%s246 + $0x8] sm:$0xff]
        %v281 = vld [vmem:[%s246 + $0x10] sm:$0xff]
        %v282 = vld [vmem:[%s246 + $0x18] sm:$0xff]
        %v283 = vld [vmem:[%s246 + $0x20] sm:$0xff]
        %v284 = vld [vmem:[%s246 + $0x28] sm:$0xff]
        %v285 = vld [vmem:[%s246 + $0x30] sm:$0xff]
        %v286 = vld [vmem:[%s246 + $0x38] sm:$0xff]
        %v287 = vld [vmem:[#allocation5] sm:$0xff]
        %v288 = vld [vmem:[#allocation5 + $0x8] sm:$0xff]
        %v289 = vld [vmem:[#allocation5 + $0x10] sm:$0xff]
        %v290 = vld [vmem:[#allocation5 + $0x18] sm:$0xff]
        %v291 = vld [vmem:[#allocation5 + $0x20] sm:$0xff]
        %v292 = vld [vmem:[#allocation5 + $0x28] sm:$0xff]
        %v293 = vld [vmem:[#allocation5 + $0x30] sm:$0xff]
        %v294 = vld [vmem:[#allocation5 + $0x38] sm:$0xff]
        %v295 = vld [vmem:[#allocation5 + $0x40] sm:$0xff]
        %v296 = vld [vmem:[#allocation5 + $0x48] sm:$0xff]
        %v297 = vld [vmem:[#allocation5 + $0x50] sm:$0xff]
        %v298 = vld [vmem:[#allocation5 + $0x58] sm:$0xff]
        %v299 = vld [vmem:[#allocation5 + $0x60] sm:$0xff]
        %v300 = vld [vmem:[#allocation5 + $0x68] sm:$0xff]
        %v301 = vld [vmem:[#allocation5 + $0x70] sm:$0xff]
        %v302 = vld [vmem:[#allocation5 + $0x78] sm:$0xff]
        %v303 = vld [vmem:[#allocation5 + $0x80] sm:$0xff]
        %v304 = vld [vmem:[#allocation5 + $0x88] sm:$0xff]
        %v305 = vld [vmem:[#allocation5 + $0x90] sm:$0xff]
        %v306 = vld [vmem:[#allocation5 + $0x98] sm:$0xff]
        %v307 = vld [vmem:[#allocation5 + $0xa0] sm:$0xff]
        %v308 = vld [vmem:[#allocation5 + $0xa8] sm:$0xff]
        %v309 = vld [vmem:[#allocation5 + $0xb0] sm:$0xff]
        %v310 = vld [vmem:[#allocation5 + $0xb8] sm:$0xff]
        %v311 = vld [vmem:[#allocation5 + $0xc0] sm:$0xff]
        %v312 = vld [vmem:[#allocation5 + $0xc8] sm:$0xff]
        %v313 = vld [vmem:[#allocation5 + $0xd0] sm:$0xff]
        %v314 = vld [vmem:[#allocation5 + $0xd8] sm:$0xff]
        %v315 = vld [vmem:[#allocation5 + $0xe0] sm:$0xff]
        %v316 = vld [vmem:[#allocation5 + $0xe8] sm:$0xff]
        %v317 = vld [vmem:[#allocation5 + $0xf0] sm:$0xff]
        %v318 = vld [vmem:[#allocation5 + $0xf8] sm:$0xff]
        %v319 = vld [vmem:[#allocation5 + $0x100] sm:$0xff]
        %v320 = vld [vmem:[#allocation5 + $0x108] sm:$0xff]
        %v321 = vld [vmem:[#allocation5 + $0x110] sm:$0xff]
        %v322 = vld [vmem:[#allocation5 + $0x118] sm:$0xff]
        %v323 = vld [vmem:[#allocation5 + $0x120] sm:$0xff]
        %v324 = vld [vmem:[#allocation5 + $0x128] sm:$0xff]
        %v325 = vld [vmem:[#allocation5 + $0x130] sm:$0xff]
        %v326 = vld [vmem:[#allocation5 + $0x138] sm:$0xff]
        %v327 = vld [vmem:[#allocation5 + $0x140] sm:$0xff]
        %v328 = vld [vmem:[#allocation5 + $0x148] sm:$0xff]
        %v329 = vld [vmem:[#allocation5 + $0x150] sm:$0xff]
        %v330 = vld [vmem:[#allocation5 + $0x158] sm:$0xff]
        %v331 = vld [vmem:[#allocation5 + $0x160] sm:$0xff]
        %v332 = vld [vmem:[#allocation5 + $0x168] sm:$0xff]
        %v333 = vld [vmem:[#allocation5 + $0x170] sm:$0xff]
        %v334 = vld [vmem:[#allocation5 + $0x178] sm:$0xff]
        %v335 = vld [vmem:[#allocation5 + $0x180] sm:$0xff]
        %v336 = vld [vmem:[#allocation5 + $0x188] sm:$0xff]
        %v337 = vld [vmem:[#allocation5 + $0x190] sm:$0xff]
        %v338 = vld [vmem:[#allocation5 + $0x198] sm:$0xff]
        %v339 = vld [vmem:[#allocation5 + $0x1a0] sm:$0xff]
        %v340 = vld [vmem:[#allocation5 + $0x1a8] sm:$0xff]
        %v341 = vld [vmem:[#allocation5 + $0x1b0] sm:$0xff]
        %v342 = vld [vmem:[#allocation5 + $0x1b8] sm:$0xff]
        %v343 = vld [vmem:[#allocation5 + $0x1c0] sm:$0xff]
        %v344 = vld [vmem:[#allocation5 + $0x1c8] sm:$0xff]
        %v345 = vld [vmem:[#allocation5 + $0x1d0] sm:$0xff]
        %v346 = vld [vmem:[#allocation5 + $0x1d8] sm:$0xff]
        %v347 = vld [vmem:[#allocation5 + $0x1e0] sm:$0xff]
        %v348 = vld [vmem:[#allocation5 + $0x1e8] sm:$0xff]
        %v349 = vld [vmem:[#allocation5 + $0x1f0] sm:$0xff]
        %v350 = vld [vmem:[#allocation5 + $0x1f8] sm:$0xff]
        %v351 = vld [vmem:[%s2] sm:$0xf]
        %v353 = vlaneseq
        %v354 = vshrl.u32 %v353, 7
        %v355 = vsub.s32 0, %v354
        %v356 = vrot.slane %v351, %v355
        %v357 = vlaneseq
        %v358 = vshrl.u32 %v357, 7
        %v359 = vsub.s32 1, %v358
        %v360 = vrot.slane %v351, %v359
        %v361 = vlaneseq
        %v362 = vshrl.u32 %v361, 7
        %v363 = vsub.s32 2, %v362
        %v364 = vrot.slane %v351, %v363
        %v365 = vlaneseq
        %v366 = vshrl.u32 %v365, 7
        %v367 = vsub.s32 3, %v366
        %v368 = vrot.slane %v351, %v367
        %v381 = vunpack.c.l.b16 %v279
        %v382 = vunpack.c.h.b16 %v279
        %v383 = vunpack.c.l.b16 %v280
        %v384 = vunpack.c.h.b16 %v280
        %v385 = vunpack.c.l.b16 %v281
        %v386 = vunpack.c.h.b16 %v281
        %v387 = vunpack.c.l.b16 %v282
        %v388 = vunpack.c.h.b16 %v282
        %v389 = vunpack.c.l.b16 %v283
        %v390 = vunpack.c.h.b16 %v283
        %v391 = vunpack.c.l.b16 %v284
        %v392 = vunpack.c.h.b16 %v284
        %v393 = vunpack.c.l.b16 %v285
        %v394 = vunpack.c.h.b16 %v285
        %v395 = vunpack.c.l.b16 %v286
        %v396 = vunpack.c.h.b16 %v286
        %v397 = vpack.c.b16 %v383, %v381
        %v398 = vpack.c.b16 %v384, %v382
        %v399 = vpack.c.b16 %v387, %v385
        %v400 = vpack.c.b16 %v388, %v386
        %v401 = vpack.c.b16 %v391, %v389
        %v402 = vpack.c.b16 %v392, %v390
        %v403 = vpack.c.b16 %v395, %v393
        %v404 = vpack.c.b16 %v396, %v394
        %v477 = vunpack.c.l.b16 %v287
        %v478 = vunpack.c.h.b16 %v287
        %v479 = vunpack.c.l.b16 %v288
        %v480 = vunpack.c.h.b16 %v288
        %v481 = vunpack.c.l.b16 %v289
        %v482 = vunpack.c.h.b16 %v289
        %v483 = vunpack.c.l.b16 %v290
        %v484 = vunpack.c.h.b16 %v290
        %v485 = vunpack.c.l.b16 %v291
        %v486 = vunpack.c.h.b16 %v291
        %v487 = vunpack.c.l.b16 %v292
        %v488 = vunpack.c.h.b16 %v292
        %v489 = vunpack.c.l.b16 %v293
        %v490 = vunpack.c.h.b16 %v293
        %v491 = vunpack.c.l.b16 %v294
        %v492 = vunpack.c.h.b16 %v294
        %v493 = vunpack.c.l.b16 %v295
        %v494 = vunpack.c.h.b16 %v295
        %v495 = vunpack.c.l.b16 %v296
        %v496 = vunpack.c.h.b16 %v296
        %v497 = vunpack.c.l.b16 %v297
        %v498 = vunpack.c.h.b16 %v297
        %v499 = vunpack.c.l.b16 %v298
        %v500 = vunpack.c.h.b16 %v298
        %v501 = vunpack.c.l.b16 %v299
        %v502 = vunpack.c.h.b16 %v299
        %v503 = vunpack.c.l.b16 %v300
        %v504 = vunpack.c.h.b16 %v300
        %v505 = vunpack.c.l.b16 %v301
        %v506 = vunpack.c.h.b16 %v301
        %v507 = vunpack.c.l.b16 %v302
        %v508 = vunpack.c.h.b16 %v302
        %v509 = vunpack.c.l.b16 %v303
        %v510 = vunpack.c.h.b16 %v303
        %v511 = vunpack.c.l.b16 %v304
        %v512 = vunpack.c.h.b16 %v304
        %v513 = vunpack.c.l.b16 %v305
        %v514 = vunpack.c.h.b16 %v305
        %v515 = vunpack.c.l.b16 %v306
        %v516 = vunpack.c.h.b16 %v306
        %v517 = vunpack.c.l.b16 %v307
        %v518 = vunpack.c.h.b16 %v307
        %v519 = vunpack.c.l.b16 %v308
        %v520 = vunpack.c.h.b16 %v308
        %v521 = vunpack.c.l.b16 %v309
        %v522 = vunpack.c.h.b16 %v309
        %v523 = vunpack.c.l.b16 %v310
        %v524 = vunpack.c.h.b16 %v310
        %v525 = vunpack.c.l.b16 %v311
        %v526 = vunpack.c.h.b16 %v311
        %v527 = vunpack.c.l.b16 %v312
        %v528 = vunpack.c.h.b16 %v312
        %v529 = vunpack.c.l.b16 %v313
        %v530 = vunpack.c.h.b16 %v313
        %v531 = vunpack.c.l.b16 %v314
        %v532 = vunpack.c.h.b16 %v314
        %v533 = vunpack.c.l.b16 %v315
        %v534 = vunpack.c.h.b16 %v315
        %v535 = vunpack.c.l.b16 %v316
        %v536 = vunpack.c.h.b16 %v316
        %v537 = vunpack.c.l.b16 %v317
        %v538 = vunpack.c.h.b16 %v317
        %v539 = vunpack.c.l.b16 %v318
        %v540 = vunpack.c.h.b16 %v318
        %v541 = vunpack.c.l.b16 %v319
        %v542 = vunpack.c.h.b16 %v319
        %v543 = vunpack.c.l.b16 %v320
        %v544 = vunpack.c.h.b16 %v320
        %v545 = vunpack.c.l.b16 %v321
        %v546 = vunpack.c.h.b16 %v321
        %v547 = vunpack.c.l.b16 %v322
        %v548 = vunpack.c.h.b16 %v322
        %v549 = vunpack.c.l.b16 %v323
        %v550 = vunpack.c.h.b16 %v323
        %v551 = vunpack.c.l.b16 %v324
        %v552 = vunpack.c.h.b16 %v324
        %v553 = vunpack.c.l.b16 %v325
        %v554 = vunpack.c.h.b16 %v325
        %v555 = vunpack.c.l.b16 %v326
        %v556 = vunpack.c.h.b16 %v326
        %v557 = vunpack.c.l.b16 %v327
        %v558 = vunpack.c.h.b16 %v327
        %v559 = vunpack.c.l.b16 %v328
        %v560 = vunpack.c.h.b16 %v328
        %v561 = vunpack.c.l.b16 %v329
        %v562 = vunpack.c.h.b16 %v329
        %v563 = vunpack.c.l.b16 %v330
        %v564 = vunpack.c.h.b16 %v330
        %v565 = vunpack.c.l.b16 %v331
        %v566 = vunpack.c.h.b16 %v331
        %v567 = vunpack.c.l.b16 %v332
        %v568 = vunpack.c.h.b16 %v332
        %v569 = vunpack.c.l.b16 %v333
        %v570 = vunpack.c.h.b16 %v333
        %v571 = vunpack.c.l.b16 %v334
        %v572 = vunpack.c.h.b16 %v334
        %v573 = vunpack.c.l.b16 %v335
        %v574 = vunpack.c.h.b16 %v335
        %v575 = vunpack.c.l.b16 %v336
        %v576 = vunpack.c.h.b16 %v336
        %v577 = vunpack.c.l.b16 %v337
        %v578 = vunpack.c.h.b16 %v337
        %v579 = vunpack.c.l.b16 %v338
        %v580 = vunpack.c.h.b16 %v338
        %v581 = vunpack.c.l.b16 %v339
        %v582 = vunpack.c.h.b16 %v339
        %v583 = vunpack.c.l.b16 %v340
        %v584 = vunpack.c.h.b16 %v340
        %v585 = vunpack.c.l.b16 %v341
        %v586 = vunpack.c.h.b16 %v341
        %v587 = vunpack.c.l.b16 %v342
        %v588 = vunpack.c.h.b16 %v342
        %v589 = vunpack.c.l.b16 %v343
        %v590 = vunpack.c.h.b16 %v343
        %v591 = vunpack.c.l.b16 %v344
        %v592 = vunpack.c.h.b16 %v344
        %v593 = vunpack.c.l.b16 %v345
        %v594 = vunpack.c.h.b16 %v345
        %v595 = vunpack.c.l.b16 %v346
        %v596 = vunpack.c.h.b16 %v346
        %v597 = vunpack.c.l.b16 %v347
        %v598 = vunpack.c.h.b16 %v347
        %v599 = vunpack.c.l.b16 %v348
        %v600 = vunpack.c.h.b16 %v348
        %v601 = vunpack.c.l.b16 %v349
        %v602 = vunpack.c.h.b16 %v349
        %v603 = vunpack.c.l.b16 %v350
        %v604 = vunpack.c.h.b16 %v350
        %v605 = vpack.c.b16 %v481, %v477
        %v606 = vpack.c.b16 %v482, %v478
        %v607 = vpack.c.b16 %v483, %v479
        %v608 = vpack.c.b16 %v484, %v480
        %v609 = vpack.c.b16 %v489, %v485
        %v610 = vpack.c.b16 %v490, %v486
        %v611 = vpack.c.b16 %v491, %v487
        %v612 = vpack.c.b16 %v492, %v488
        %v613 = vpack.c.b16 %v497, %v493
        %v614 = vpack.c.b16 %v498, %v494
        %v615 = vpack.c.b16 %v499, %v495
        %v616 = vpack.c.b16 %v500, %v496
        %v617 = vpack.c.b16 %v505, %v501
        %v618 = vpack.c.b16 %v506, %v502
        %v619 = vpack.c.b16 %v507, %v503
        %v620 = vpack.c.b16 %v508, %v504
        %v621 = vpack.c.b16 %v513, %v509
        %v622 = vpack.c.b16 %v514, %v510
        %v623 = vpack.c.b16 %v515, %v511
        %v624 = vpack.c.b16 %v516, %v512
        %v625 = vpack.c.b16 %v521, %v517
        %v626 = vpack.c.b16 %v522, %v518
        %v627 = vpack.c.b16 %v523, %v519
        %v628 = vpack.c.b16 %v524, %v520
        %v629 = vpack.c.b16 %v529, %v525
        %v630 = vpack.c.b16 %v530, %v526
        %v631 = vpack.c.b16 %v531, %v527
        %v632 = vpack.c.b16 %v532, %v528
        %v633 = vpack.c.b16 %v537, %v533
        %v634 = vpack.c.b16 %v538, %v534
        %v635 = vpack.c.b16 %v539, %v535
        %v636 = vpack.c.b16 %v540, %v536
        %v637 = vpack.c.b16 %v545, %v541
        %v638 = vpack.c.b16 %v546, %v542
        %v639 = vpack.c.b16 %v547, %v543
        %v640 = vpack.c.b16 %v548, %v544
        %v641 = vpack.c.b16 %v553, %v549
        %v642 = vpack.c.b16 %v554, %v550
        %v643 = vpack.c.b16 %v555, %v551
        %v644 = vpack.c.b16 %v556, %v552
        %v645 = vpack.c.b16 %v561, %v557
        %v646 = vpack.c.b16 %v562, %v558
        %v647 = vpack.c.b16 %v563, %v559
        %v648 = vpack.c.b16 %v564, %v560
        %v649 = vpack.c.b16 %v569, %v565
        %v650 = vpack.c.b16 %v570, %v566
        %v651 = vpack.c.b16 %v571, %v567
        %v652 = vpack.c.b16 %v572, %v568
        %v653 = vpack.c.b16 %v577, %v573
        %v654 = vpack.c.b16 %v578, %v574
        %v655 = vpack.c.b16 %v579, %v575
        %v656 = vpack.c.b16 %v580, %v576
        %v657 = vpack.c.b16 %v585, %v581
        %v658 = vpack.c.b16 %v586, %v582
        %v659 = vpack.c.b16 %v587, %v583
        %v660 = vpack.c.b16 %v588, %v584
        %v661 = vpack.c.b16 %v593, %v589
        %v662 = vpack.c.b16 %v594, %v590
        %v663 = vpack.c.b16 %v595, %v591
        %v664 = vpack.c.b16 %v596, %v592
        %v665 = vpack.c.b16 %v601, %v597
        %v666 = vpack.c.b16 %v602, %v598
        %v667 = vpack.c.b16 %v603, %v599
        %v668 = vpack.c.b16 %v604, %v600
        %733 = vmatprep.subr.bf16.mxu0 %v606
        %734 = vmatpush1.bf16.msra.mxu0 %v605
        %735 = vmatprep.subr.bf16.mxu0 %v610
        %736 = vmatpush1.bf16.msra.mxu0 %v609
        %737 = vmatprep.subr.bf16.mxu0 %v614
        %738 = vmatpush1.bf16.msra.mxu0 %v613
        %739 = vmatprep.subr.bf16.mxu0 %v618
        %740 = vmatpush1.bf16.msra.mxu0 %v617
        %741 = vmatprep.subr.bf16.mxu0 %v622
        %742 = vmatpush1.bf16.msra.mxu0 %v621
        %743 = vmatprep.subr.bf16.mxu0 %v626
        %744 = vmatpush1.bf16.msra.mxu0 %v625
        %745 = vmatprep.subr.bf16.mxu0 %v630
        %746 = vmatpush1.bf16.msra.mxu0 %v629
        %747 = vmatprep.subr.bf16.mxu0 %v634
        %748 = vmatpush1.bf16.msra.mxu0 %v633
        %749 = vmatprep.subr.bf16.mxu0 %v638
        %750 = vmatpush1.bf16.msra.mxu0 %v637
        %751 = vmatprep.subr.bf16.mxu0 %v642
        %752 = vmatpush1.bf16.msra.mxu0 %v641
        %753 = vmatprep.subr.bf16.mxu0 %v646
        %754 = vmatpush1.bf16.msra.mxu0 %v645
        %755 = vmatprep.subr.bf16.mxu0 %v650
        %756 = vmatpush1.bf16.msra.mxu0 %v649
        %757 = vmatprep.subr.bf16.mxu0 %v654
        %758 = vmatpush1.bf16.msra.mxu0 %v653
        %759 = vmatprep.subr.bf16.mxu0 %v658
        %760 = vmatpush1.bf16.msra.mxu0 %v657
        %761 = vmatprep.subr.bf16.mxu0 %v662
        %762 = vmatpush1.bf16.msra.mxu0 %v661
        %763 = vmatprep.subr.bf16.mxu0 %v666
        %764 = vmatpush1.bf16.msra.mxu0 %v665
        %765 = vmatprep.mubr.bf16.mxu0 %v398
        %766 = vmatmul.mubr.bf16.gmra.mrb[0].mxu0 %v397
        %v767 = vpop.f32.mrb[0].mxu0
        %v768 = vadd.f32 %v356, %v767
        %v769 = vpop.f32.mrb[0].mxu0
        %v770 = vadd.f32 %v360, %v769
        %v771 = vpop.f32.mrb[0].mxu0
        %v772 = vadd.f32 %v356, %v771
        %v773 = vpop.f32.mrb[0].mxu0
        %v774 = vadd.f32 %v360, %v773
        %775 = vmatprep.mubr.bf16.mxu0 %v400
        %776 = vmatmul.mubr.bf16.gmra.mrb[0].mxu0 %v399
        %v777 = vpop.f32.mrb[0].mxu0
        %v778 = vadd.f32 %v356, %v777
        %v779 = vpop.f32.mrb[0].mxu0
        %v780 = vadd.f32 %v360, %v779
        %v781 = vpop.f32.mrb[0].mxu0
        %v782 = vadd.f32 %v356, %v781
        %v783 = vpop.f32.mrb[0].mxu0
        %v784 = vadd.f32 %v360, %v783
        %785 = vmatprep.mubr.bf16.mxu0 %v402
        %786 = vmatmul.mubr.bf16.gmra.mrb[0].mxu0 %v401
        %v787 = vpop.f32.mrb[0].mxu0
        %v788 = vadd.f32 %v356, %v787
        %v789 = vpop.f32.mrb[0].mxu0
        %v790 = vadd.f32 %v360, %v789
        %v791 = vpop.f32.mrb[0].mxu0
        %v792 = vadd.f32 %v356, %v791
        %v793 = vpop.f32.mrb[0].mxu0
        %v794 = vadd.f32 %v360, %v793
        %795 = vmatprep.mubr.bf16.mxu0 %v404
        %796 = vmatmul.mubr.bf16.gmra.mrb[0].mxu0 %v403
        %v797 = vpop.f32.mrb[0].mxu0
        %v798 = vadd.f32 %v356, %v797
        %v799 = vpop.f32.mrb[0].mxu0
        %v800 = vadd.f32 %v360, %v799
        %v801 = vpop.f32.mrb[0].mxu0
        %v802 = vadd.f32 %v356, %v801
        %v803 = vpop.f32.mrb[0].mxu0
        %v804 = vadd.f32 %v360, %v803
        %805 = vdwg.mxu0
        %806 = vmatprep.subr.bf16.mxu0 %v608
        %807 = vmatpush1.bf16.msra.mxu0 %v607
        %808 = vmatprep.subr.bf16.mxu0 %v612
        %809 = vmatpush1.bf16.msra.mxu0 %v611
        %810 = vmatprep.subr.bf16.mxu0 %v616
        %811 = vmatpush1.bf16.msra.mxu0 %v615
        %812 = vmatprep.subr.bf16.mxu0 %v620
        %813 = vmatpush1.bf16.msra.mxu0 %v619
        %814 = vmatprep.subr.bf16.mxu0 %v624
        %815 = vmatpush1.bf16.msra.mxu0 %v623
        %816 = vmatprep.subr.bf16.mxu0 %v628
        %817 = vmatpush1.bf16.msra.mxu0 %v627
        %818 = vmatprep.subr.bf16.mxu0 %v632
        %819 = vmatpush1.bf16.msra.mxu0 %v631
        %820 = vmatprep.subr.bf16.mxu0 %v636
        %821 = vmatpush1.bf16.msra.mxu0 %v635
        %822 = vmatprep.subr.bf16.mxu0 %v640
        %823 = vmatpush1.bf16.msra.mxu0 %v639
        %824 = vmatprep.subr.bf16.mxu0 %v644
        %825 = vmatpush1.bf16.msra.mxu0 %v643
        %826 = vmatprep.subr.bf16.mxu0 %v648
        %827 = vmatpush1.bf16.msra.mxu0 %v647
        %828 = vmatprep.subr.bf16.mxu0 %v652
        %829 = vmatpush1.bf16.msra.mxu0 %v651
        %830 = vmatprep.subr.bf16.mxu0 %v656
        %831 = vmatpush1.bf16.msra.mxu0 %v655
        %832 = vmatprep.subr.bf16.mxu0 %v660
        %833 = vmatpush1.bf16.msra.mxu0 %v659
        %834 = vmatprep.subr.bf16.mxu0 %v664
        %835 = vmatpush1.bf16.msra.mxu0 %v663
        %836 = vmatprep.subr.bf16.mxu0 %v668
        %837 = vmatpush1.bf16.msra.mxu0 %v667
        %838 = vmatprep.mubr.bf16.mxu0 %v398
        %839 = vmatmul.mubr.bf16.gmra.mrb[0].mxu0 %v397
        %v840 = vpop.f32.mrb[0].mxu0
        %v841 = vadd.f32 %v364, %v840
        %v842 = vpop.f32.mrb[0].mxu0
        %v843 = vadd.f32 %v368, %v842
        %v844 = vpop.f32.mrb[0].mxu0
        %v845 = vadd.f32 %v364, %v844
        %v846 = vpop.f32.mrb[0].mxu0
        %v847 = vadd.f32 %v368, %v846
        %848 = vmatprep.mubr.bf16.mxu0 %v400
        %849 = vmatmul.mubr.bf16.gmra.mrb[0].mxu0 %v399
        %v850 = vpop.f32.mrb[0].mxu0
        %v851 = vadd.f32 %v364, %v850
        %v852 = vpop.f32.mrb[0].mxu0
        %v853 = vadd.f32 %v368, %v852
        %v854 = vpop.f32.mrb[0].mxu0
        %v855 = vadd.f32 %v364, %v854
        %v856 = vpop.f32.mrb[0].mxu0
        %v857 = vadd.f32 %v368, %v856
        %858 = vmatprep.mubr.bf16.mxu0 %v402
        %859 = vmatmul.mubr.bf16.gmra.mrb[0].mxu0 %v401
        %v860 = vpop.f32.mrb[0].mxu0
        %v861 = vadd.f32 %v364, %v860
        %v862 = vpop.f32.mrb[0].mxu0
        %v863 = vadd.f32 %v368, %v862
        %v864 = vpop.f32.mrb[0].mxu0
        %v865 = vadd.f32 %v364, %v864
        %v866 = vpop.f32.mrb[0].mxu0
        %v867 = vadd.f32 %v368, %v866
        %868 = vmatprep.mubr.bf16.mxu0 %v404
        %869 = vmatmul.mubr.bf16.gmra.mrb[0].mxu0 %v403
        %v870 = vpop.f32.mrb[0].mxu0
        %v871 = vadd.f32 %v364, %v870
        %v872 = vpop.f32.mrb[0].mxu0
        %v873 = vadd.f32 %v368, %v872
        %v874 = vpop.f32.mrb[0].mxu0
        %v875 = vadd.f32 %v364, %v874
        %v876 = vpop.f32.mrb[0].mxu0
        %v877 = vadd.f32 %v368, %v876
        %878 = vdwg.mxu0
        %v879 = vmax.f32 %v768, 0.0
        %v880 = vmax.f32 %v770, 0.0
        %v881 = vmax.f32 %v841, 0.0
        %v882 = vmax.f32 %v843, 0.0
        %v883 = vmax.f32 %v772, 0.0
        %v884 = vmax.f32 %v774, 0.0
        %v885 = vmax.f32 %v845, 0.0
        %v886 = vmax.f32 %v847, 0.0
        %v887 = vmax.f32 %v778, 0.0
        %v888 = vmax.f32 %v780, 0.0
        %v889 = vmax.f32 %v851, 0.0
        %v890 = vmax.f32 %v853, 0.0
        %v891 = vmax.f32 %v782, 0.0
        %v892 = vmax.f32 %v784, 0.0
        %v893 = vmax.f32 %v855, 0.0
        %v894 = vmax.f32 %v857, 0.0
        %v895 = vmax.f32 %v788, 0.0
        %v896 = vmax.f32 %v790, 0.0
        %v897 = vmax.f32 %v861, 0.0
        %v898 = vmax.f32 %v863, 0.0
        %v899 = vmax.f32 %v792, 0.0
        %v900 = vmax.f32 %v794, 0.0
        %v901 = vmax.f32 %v865, 0.0
        %v902 = vmax.f32 %v867, 0.0
        %v903 = vmax.f32 %v798, 0.0
        %v904 = vmax.f32 %v800, 0.0
        %v905 = vmax.f32 %v871, 0.0
        %v906 = vmax.f32 %v873, 0.0
        %v907 = vmax.f32 %v802, 0.0
        %v908 = vmax.f32 %v804, 0.0
        %v909 = vmax.f32 %v875, 0.0
        %v910 = vmax.f32 %v877, 0.0
        %v911 = vld [vmem:[%s3] sm:$0xf]
        %v913 = vlaneseq
        %v914 = vshrl.u32 %v913, 7
        %v915 = vsub.s32 0, %v914
        %v916 = vrot.slane %v911, %v915
        %v917 = vlaneseq
        %v918 = vshrl.u32 %v917, 7
        %v919 = vsub.s32 1, %v918
        %v920 = vrot.slane %v911, %v919
        %v921 = vlaneseq
        %v922 = vshrl.u32 %v921, 7
        %v923 = vsub.s32 2, %v922
        %v924 = vrot.slane %v911, %v923
        %v925 = vlaneseq
        %v926 = vshrl.u32 %v925, 7
        %v927 = vsub.s32 3, %v926
        %v928 = vrot.slane %v911, %v927
        %v933 = vmul.f32 %v879, %v916
        %v934 = vmul.f32 %v880, %v920
        %v935 = vmul.f32 %v881, %v924
        %v936 = vmul.f32 %v882, %v928
        %v937 = vmul.f32 %v883, %v916
        %v938 = vmul.f32 %v884, %v920
        %v939 = vmul.f32 %v885, %v924
        %v940 = vmul.f32 %v886, %v928
        %v941 = vmul.f32 %v887, %v916
        %v942 = vmul.f32 %v888, %v920
        %v943 = vmul.f32 %v889, %v924
        %v944 = vmul.f32 %v890, %v928
        %v945 = vmul.f32 %v891, %v916
        %v946 = vmul.f32 %v892, %v920
        %v947 = vmul.f32 %v893, %v924
        %v948 = vmul.f32 %v894, %v928
        %v949 = vmul.f32 %v895, %v916
        %v950 = vmul.f32 %v896, %v920
        %v951 = vmul.f32 %v897, %v924
        %v952 = vmul.f32 %v898, %v928
        %v953 = vmul.f32 %v899, %v916
        %v954 = vmul.f32 %v900, %v920
        %v955 = vmul.f32 %v901, %v924
        %v956 = vmul.f32 %v902, %v928
        %v957 = vmul.f32 %v903, %v916
        %v958 = vmul.f32 %v904, %v920
        %v959 = vmul.f32 %v905, %v924
        %v960 = vmul.f32 %v906, %v928
        %v961 = vmul.f32 %v907, %v916
        %v962 = vmul.f32 %v908, %v920
        %v963 = vmul.f32 %v909, %v924
        %v964 = vmul.f32 %v910, %v928
        %v965 = vld [vmem:[%s4] sm:$0xf]
        %v967 = vlaneseq
        %v968 = vshrl.u32 %v967, 7
        %v969 = vsub.s32 0, %v968
        %v970 = vrot.slane %v965, %v969
        %v971 = vlaneseq
        %v972 = vshrl.u32 %v971, 7
        %v973 = vsub.s32 1, %v972
        %v974 = vrot.slane %v965, %v973
        %v975 = vlaneseq
        %v976 = vshrl.u32 %v975, 7
        %v977 = vsub.s32 2, %v976
        %v978 = vrot.slane %v965, %v977
        %v979 = vlaneseq
        %v980 = vshrl.u32 %v979, 7
        %v981 = vsub.s32 3, %v980
        %v982 = vrot.slane %v965, %v981
        %v987 = vadd.f32 %v933, %v970
        %v988 = vadd.f32 %v934, %v974
        %v989 = vadd.f32 %v935, %v978
        %v990 = vadd.f32 %v936, %v982
        %v991 = vadd.f32 %v937, %v970
        %v992 = vadd.f32 %v938, %v974
        %v993 = vadd.f32 %v939, %v978
        %v994 = vadd.f32 %v940, %v982
        %v995 = vadd.f32 %v941, %v970
        %v996 = vadd.f32 %v942, %v974
        %v997 = vadd.f32 %v943, %v978
        %v998 = vadd.f32 %v944, %v982
        %v999 = vadd.f32 %v945, %v970
        %v1000 = vadd.f32 %v946, %v974
        %v1001 = vadd.f32 %v947, %v978
        %v1002 = vadd.f32 %v948, %v982
        %v1003 = vadd.f32 %v949, %v970
        %v1004 = vadd.f32 %v950, %v974
        %v1005 = vadd.f32 %v951, %v978
        %v1006 = vadd.f32 %v952, %v982
        %v1007 = vadd.f32 %v953, %v970
        %v1008 = vadd.f32 %v954, %v974
        %v1009 = vadd.f32 %v955, %v978
        %v1010 = vadd.f32 %v956, %v982
        %v1011 = vadd.f32 %v957, %v970
        %v1012 = vadd.f32 %v958, %v974
        %v1013 = vadd.f32 %v959, %v978
        %v1014 = vadd.f32 %v960, %v982
        %v1015 = vadd.f32 %v961, %v970
        %v1016 = vadd.f32 %v962, %v974
        %v1017 = vadd.f32 %v963, %v978
        %v1018 = vadd.f32 %v964, %v982
        %v1019 = vpack.c.bf16 %v991, %v987
        %v1020 = vpack.c.bf16 %v992, %v988
        %v1021 = vpack.c.bf16 %v993, %v989
        %v1022 = vpack.c.bf16 %v994, %v990
        %v1023 = vpack.c.bf16 %v999, %v995
        %v1024 = vpack.c.bf16 %v1000, %v996
        %v1025 = vpack.c.bf16 %v1001, %v997
        %v1026 = vpack.c.bf16 %v1002, %v998
        %v1027 = vpack.c.bf16 %v1007, %v1003
        %v1028 = vpack.c.bf16 %v1008, %v1004
        %v1029 = vpack.c.bf16 %v1009, %v1005
        %v1030 = vpack.c.bf16 %v1010, %v1006
        %v1031 = vpack.c.bf16 %v1015, %v1011
        %v1032 = vpack.c.bf16 %v1016, %v1012
        %v1033 = vpack.c.bf16 %v1017, %v1013
        %v1034 = vpack.c.bf16 %v1018, %v1014
        %v1051 = vunpack.c.l.b16 %v1019
        %v1052 = vunpack.c.l.b16 %v1020
        %v1053 = vunpack.c.l.b16 %v1021
        %v1054 = vunpack.c.l.b16 %v1022
        %v1055 = vunpack.c.h.b16 %v1019
        %v1056 = vunpack.c.h.b16 %v1020
        %v1057 = vunpack.c.h.b16 %v1021
        %v1058 = vunpack.c.h.b16 %v1022
        %v1059 = vunpack.c.l.b16 %v1023
        %v1060 = vunpack.c.l.b16 %v1024
        %v1061 = vunpack.c.l.b16 %v1025
        %v1062 = vunpack.c.l.b16 %v1026
        %v1063 = vunpack.c.h.b16 %v1023
        %v1064 = vunpack.c.h.b16 %v1024
        %v1065 = vunpack.c.h.b16 %v1025
        %v1066 = vunpack.c.h.b16 %v1026
        %v1067 = vunpack.c.l.b16 %v1027
        %v1068 = vunpack.c.l.b16 %v1028
        %v1069 = vunpack.c.l.b16 %v1029
        %v1070 = vunpack.c.l.b16 %v1030
        %v1071 = vunpack.c.h.b16 %v1027
        %v1072 = vunpack.c.h.b16 %v1028
        %v1073 = vunpack.c.h.b16 %v1029
        %v1074 = vunpack.c.h.b16 %v1030
        %v1075 = vunpack.c.l.b16 %v1031
        %v1076 = vunpack.c.l.b16 %v1032
        %v1077 = vunpack.c.l.b16 %v1033
        %v1078 = vunpack.c.l.b16 %v1034
        %v1079 = vunpack.c.h.b16 %v1031
        %v1080 = vunpack.c.h.b16 %v1032
        %v1081 = vunpack.c.h.b16 %v1033
        %v1082 = vunpack.c.h.b16 %v1034
        %v1083 = vpack.c.b16 %v1052, %v1051
        %v1084 = vpack.c.b16 %v1054, %v1053
        %v1085 = vpack.c.b16 %v1056, %v1055
        %v1086 = vpack.c.b16 %v1058, %v1057
        %v1087 = vpack.c.b16 %v1060, %v1059
        %v1088 = vpack.c.b16 %v1062, %v1061
        %v1089 = vpack.c.b16 %v1064, %v1063
        %v1090 = vpack.c.b16 %v1066, %v1065
        %v1091 = vpack.c.b16 %v1068, %v1067
        %v1092 = vpack.c.b16 %v1070, %v1069
        %v1093 = vpack.c.b16 %v1072, %v1071
        %v1094 = vpack.c.b16 %v1074, %v1073
        %v1095 = vpack.c.b16 %v1076, %v1075
        %v1096 = vpack.c.b16 %v1078, %v1077
        %v1097 = vpack.c.b16 %v1080, %v1079
        %v1098 = vpack.c.b16 %v1082, %v1081
        %1115 = vst [vmem:[%s276] sm:$0xff] %v1083
        %1116 = vst [vmem:[%s276 + $0x8] sm:$0xff] %v1084
        %1117 = vst [vmem:[%s276 + $0x10] sm:$0xff] %v1085
        %1118 = vst [vmem:[%s276 + $0x18] sm:$0xff] %v1086
        %1119 = vst [vmem:[%s276 + $0x20] sm:$0xff] %v1087
        %1120 = vst [vmem:[%s276 + $0x28] sm:$0xff] %v1088
        %1121 = vst [vmem:[%s276 + $0x30] sm:$0xff] %v1089
        %1122 = vst [vmem:[%s276 + $0x38] sm:$0xff] %v1090
        %1123 = vst [vmem:[%s276 + $0x40] sm:$0xff] %v1091
        %1124 = vst [vmem:[%s276 + $0x48] sm:$0xff] %v1092
        %1125 = vst [vmem:[%s276 + $0x50] sm:$0xff] %v1093
        %1126 = vst [vmem:[%s276 + $0x58] sm:$0xff] %v1094
        %1127 = vst [vmem:[%s276 + $0x60] sm:$0xff] %v1095
        %1128 = vst [vmem:[%s276 + $0x68] sm:$0xff] %v1096
        %1129 = vst [vmem:[%s276 + $0x70] sm:$0xff] %v1097
        %1130 = vst [vmem:[%s276 + $0x78] sm:$0xff] %v1098
        %s1131 = sand.u32 %s157, 1
        %s1132 = scalar_lea.sflag [#allocation4], %s1131
        %s1133 = sand.u32 %s157, 1
        %s1134 = smul.addr %s1133, 128
        %s1135 = scalar_lea.vmem [#allocation7], %s1134
        // Predicated region
        $region49: #{tpu_custom_call.1} parent=39 // pred_check
          %p1136 = pneg %p167
        $region50: #{tpu_custom_call.1} parent=39 // pred_check_branch
          %1138 = sbr.rel (%p1136) target = $region52
        $region51: #{tpu_custom_call.1} parent=39 // pred_region
          %s1139 = smul.u32 8, %s28
          %s1141 = ssub.s32 2048, 2048
          %1142 = vsyncadd %s1132, %s1141
          %s1143 = smul.addr %s1139, 4
          %s1144 = smul.addr %s27, 96
          %s1145 = sadd.s32 %s1143, %s1144
          %s1146 = smul.addr %s1145, 64
          %s1147 = scalar_lea.hbm %s5, %s1146
          %s1148 = sshll.u32 %s1135, 4
          %s1149 = int_to_ptr.vmem [resolvable:$true] %s1148
          %1154 = dma.vmem_to_hbm [thread:$0]  %s1149, 2048, %s1147, %s1132, 256, 256, 16
        $region52: #{tpu_custom_call.1} parent=39 // pred_fallthru
          _
      $region40: #{tpu_custom_call.1} parent=5 // pred_fallthru
        _
      %p1155 = scmp.le.s32.totalorder 2, %s18
      // Predicated region
      $region53: #{tpu_custom_call.1} parent=5 // pred_check
        %p1156 = pneg %p1155
      $region54: #{tpu_custom_call.1} parent=5 // pred_check_branch
        %1158 = sbr.rel (%p1156) target = $region56
      $region55: #{tpu_custom_call.1} parent=5 // pred_region
        %s1159 = ssub.s32 %s18, 2
        // Predicated region
        $region57: #{tpu_custom_call.1} parent=55 // pred_check
          %p1160 = pneg %p173
        $region58: #{tpu_custom_call.1} parent=55 // pred_check_branch
          %1162 = sbr.rel (%p1160) target = $region60
        $region59: #{tpu_custom_call.1} parent=55 // pred_region
          %s1163 = sand.u32 %s158, 1
          %s1164 = scalar_lea.sflag [#allocation4], %s1163
          %s1165 = sand.u32 %s158, 1
          %s1166 = smul.addr %s1165, 128
          %s1167 = scalar_lea.vmem [#allocation7], %s1166
          %1168 = dma.done %s1164, 2048
        $region60: #{tpu_custom_call.1} parent=55 // pred_fallthru
          _
      $region56: #{tpu_custom_call.1} parent=5 // pred_fallthru
        _
    $region6: #{tpu_custom_call.1} parent=1 // loop_footer
      %s22 = sadd.s32 1, %s18
    $region7: #{tpu_custom_call.1} parent=1 // loop_footer_branch
      %17 = sbr.rel target = $region3
    $region8: #{tpu_custom_call.1} parent=1 // loop_exit
      _
    %1169 = vsyncpa [#allocation3], 1
    %s1170 = scalar_lea.sflag [#allocation3], 1
    %1171 = vsyncpa %s1170, 1
    %1172 = vsyncpa [#allocation6], 1
    %1173 = vsyncpa [#allocation4], 1
    %s1174 = scalar_lea.sflag [#allocation4], 1
    %1175 = vsyncpa %s1174, 1

</llo_original>
